<compile_context>
chip_gen: v6e
topology: v6e:2x2x1
jax: 0.10.0
libtpu: 0.0.40
codegen_flags: <defaults>
</compile_context>

<pallas_src>
import jax
import jax.numpy as jnp
from jax.experimental import pallas as pl
from jax.experimental.pallas import tpu as pltpu


_MAX_TILE_ROWS = 2048  # rows per grid step; ~2.5 MiB double-buffered at f32


def _round_up(x, m):
    return (x + m - 1) // m * m


def _fused_masked_mlp_kernel(x_ref, w13_ref, b13_ref, w24_ref, b24_ref,
                             logits_ref, value_ref):
    """Both MLP heads + action masking for one batch tile.

    x_ref      [TB, Din]  f32  (action_mask occupies the first A columns)
    w13_ref    [Din, 2H]  bf16 fused layer-1 weights of both heads [W1 | W3]
    b13_ref    [1, 2H]    f32
    w24_ref    [2H, A+1]  bf16 block-diagonal layer-2 (policy cols 0..A-1,
                          value col A)
    b24_ref    [1, A+1]   f32
    logits_ref [TB, A]    f32 output
    value_ref  [TB, 1]    f32 output
    """
    x = x_ref[...]                                       # f32 activations
    n_actions = logits_ref.shape[1]
    mm_dtype = w13_ref.dtype                             # bf16 (f32 accum kept)

    # Layer 1 of both heads in one lane-full matmul: relu(x @ [W1|W3] + [b1|b3])
    h = jnp.dot(x.astype(mm_dtype), w13_ref[...],
                preferred_element_type=jnp.float32)
    h = jnp.maximum(h + b13_ref[...], 0.0)               # [TB, 2H] f32

    # Layer 2 of both heads via block-diagonal W24 -> [TB, A+1]:
    #   cols 0..A-1 = policy logits, col A = value.
    out = jnp.dot(h.astype(mm_dtype), w24_ref[...],
                  preferred_element_type=jnp.float32)
    out = out + b24_ref[...]

    # Action-mask penalty: mask = first A columns of obs_tensor (exact f32
    # zeros/ones, so bf16 weight casting never touches it).
    inf_mask = jnp.log(x[:, :n_actions] + jnp.float32(1e-10))

    logits_ref[...] = out[:, :n_actions] + inf_mask
    value_ref[...] = out[:, n_actions:n_actions + 1]


def pack_params(params, n_actions, *, matmul_dtype=jnp.bfloat16):
    """Fuse the four Linear layers into the kernel's packed layout."""
    hidden = params["w1"].shape[1]                     # 64 in the module
    n_out = n_actions + 1                              # logits cols + value col

    w13 = jnp.concatenate([params["w1"], params["w3"]], axis=1)   # [Din, 2H]
    b13 = jnp.concatenate([params["b1"], params["b3"]], axis=1)   # [1, 2H]

    w24 = jnp.zeros((2 * hidden, n_out), jnp.float32)
    w24 = w24.at[:hidden, :n_actions].set(params["w2"])           # policy block
    w24 = w24.at[hidden:, n_actions].set(params["w4"][:, 0])      # value column

    b24 = jnp.zeros((1, n_out), jnp.float32)
    b24 = b24.at[:, :n_actions].set(params["b2"])
    b24 = b24.at[:, n_actions].set(params["b4"][0, 0])

    return dict(w13=w13.astype(matmul_dtype), b13=b13.astype(jnp.float32),
                w24=w24.astype(matmul_dtype), b24=b24.astype(jnp.float32))


@jax.jit
def action_masked_model_forward(obs_tensor, packed):
    """Returns (logits [B, A], value_out [B]) like the PyTorch module."""
    B, din = obs_tensor.shape
    h2 = packed["w13"].shape[1]          # 2 * hidden
    n_out = packed["w24"].shape[1]       # A + 1
    n_actions = n_out - 1

    # Batch tiling: enough steps to bound the tile at _MAX_TILE_ROWS, at least
    # 2 steps when B >= 16 (so v7x's second TensorCore gets work), and tb
    # derived from B so padding waste is bounded by rounding, not a full tile.
    min_steps = 2 if B >= 16 else 1
    n_steps = max(pl.cdiv(B, _MAX_TILE_ROWS), min_steps)
    tb = _round_up(pl.cdiv(B, n_steps), 8)
    b_pad = _round_up(B, tb)
    n_steps = b_pad // tb

    x = obs_tensor
    if b_pad != B:
        # Zero rows -> finite garbage (log(1e-10)); sliced off below.
        x = jnp.pad(x, ((0, b_pad - B), (0, 0)))

    logits_p, value_p = pl.pallas_call(
        _fused_masked_mlp_kernel,
        out_shape=(jax.ShapeDtypeStruct((b_pad, n_actions), jnp.float32),
                   jax.ShapeDtypeStruct((b_pad, 1), jnp.float32)),
        grid_spec=pltpu.PrefetchScalarGridSpec(
            num_scalar_prefetch=0,
            grid=(n_steps,),
            in_specs=[
                pl.BlockSpec((tb, din), lambda i: (i, 0)),      # activations
                pl.BlockSpec((din, h2), lambda i: (0, 0)),      # W13 (resident)
                pl.BlockSpec((1, h2), lambda i: (0, 0)),        # b13
                pl.BlockSpec((h2, n_out), lambda i: (0, 0)),    # W24 (resident)
                pl.BlockSpec((1, n_out), lambda i: (0, 0)),     # b24
            ],
            out_specs=[
                pl.BlockSpec((tb, n_actions), lambda i: (i, 0)),  # logits
                pl.BlockSpec((tb, 1), lambda i: (i, 0)),          # value
            ],
        ),
        compiler_params=pltpu.CompilerParams(
            dimension_semantics=("parallel",),   # v7x: both TCs split the batch
        ),
    )(x, packed["w13"], packed["b13"], packed["w24"], packed["b24"])

    if b_pad != B:
        logits_p = logits_p[:B]
        value_p = value_p[:B]
    return logits_p, value_p[:, 0]        # == value_head(...).squeeze(-1)


def init_params(key, input_dim, hidden, n_actions):
    """Deterministic synthetic parameters, shapes match the nn.Linear layers."""
    ks = jax.random.split(key, 8)

    def lin(kw, kb, fan_in, fan_out):
        lim = 1.0 / jnp.sqrt(jnp.float32(fan_in))
        w = jax.random.uniform(kw, (fan_in, fan_out), jnp.float32, -lim, lim)
        b = jax.random.uniform(kb, (1, fan_out), jnp.float32, -lim, lim)
        return w, b

    w1, b1 = lin(ks[0], ks[1], input_dim, hidden)      # policy_net[0]
    w2, b2 = lin(ks[2], ks[3], hidden, n_actions)      # policy_net[2]
    w3, b3 = lin(ks[4], ks[5], input_dim, hidden)      # value_head[0]
    w4, b4 = lin(ks[6], ks[7], hidden, 1)              # value_head[2]
    return dict(w1=w1, b1=b1, w2=w2, b2=b2, w3=w3, b3=b3, w4=w4, b4=b4)


if __name__ == "__main__":
    key = jax.random.PRNGKey(0)
    k_par, k_data = jax.random.split(key)

    # Small synthetic shapes consistent with the module's forward():
    n_actions = 8              # action_space.n
    obs_dim = 24               # "observations" Box flattened size
    hidden = 64                # fixed in the module
    input_dim = n_actions + obs_dim   # calculate_input_dim over the Dict space

    params = init_params(k_par, input_dim, hidden, n_actions)
    packed = pack_params(params, n_actions)   # bf16 matmul operands, f32 accum

    # Plain-JAX reference (matches the PyTorch module; mm_dtype emulates the
    # kernel's bf16-operand / f32-accumulation matmuls when set to bf16).
    def ref(x, m, p, mm_dtype):
        def mm(a, w):
            return jnp.dot(a.astype(mm_dtype), w.astype(mm_dtype),
                           preferred_element_type=jnp.float32)
        h = jnp.maximum(mm(x, p["w1"]) + p["b1"], 0.0)
        lg = mm(h, p["w2"]) + p["b2"] + jnp.log(m + 1e-10)
        hv = jnp.maximum(mm(x, p["w3"]) + p["b3"], 0.0)
        v = (mm(hv, p["w4"]) + p["b4"])[:, 0]
        return lg, v

    for B in (8, 40):   # B=40 exercises the multi-step grid + batch padding
        kb = jax.random.fold_in(k_data, B)
        k_obs, k_mask = jax.random.split(kb)
        observations = jax.random.normal(k_obs, (B, obs_dim), jnp.float32)
        action_mask = (jax.random.uniform(k_mask, (B, n_actions)) > 0.5
                       ).astype(jnp.float32)
        action_mask = action_mask.at[:, 0].set(1.0)   # >=1 valid action per row

        # flatten_obs + torch.cat([...], dim=-1); dict order: action_mask first.
        obs_tensor = jnp.concatenate([action_mask, observations], axis=-1)

        logits, value_out = action_masked_model_forward(obs_tensor, packed)
        jax.block_until_ready((logits, value_out))

        assert logits.shape == (B, n_actions) and value_out.shape == (B,)

        lg_bf, v_bf = ref(obs_tensor, action_mask, params, jnp.bfloat16)
        lg_f32, v_f32 = ref(obs_tensor, action_mask, params, jnp.float32)
        assert jnp.allclose(logits, lg_bf, atol=5e-3, rtol=5e-3)
        assert jnp.allclose(value_out, v_bf, atol=5e-3, rtol=5e-3)
        assert jnp.allclose(logits, lg_f32, atol=5e-2, rtol=5e-2)
        assert jnp.allclose(value_out, v_f32, atol=5e-2, rtol=5e-2)

    print("KERNEL_OK")
</pallas_src>

<mosaic_0001>
module attributes {stable_mosaic.version = 11 : i64} {
  func.func @_fused_masked_mlp_kernel(%arg0: i32, %arg1: memref<8x32xf32, #tpu.memory_space<vmem>>, %arg2: memref<32x128xbf16, #tpu.memory_space<vmem>>, %arg3: memref<1x128xf32, #tpu.memory_space<vmem>>, %arg4: memref<128x9xbf16, #tpu.memory_space<vmem>>, %arg5: memref<1x9xf32, #tpu.memory_space<vmem>>, %arg6: memref<8x8xf32, #tpu.memory_space<vmem>>, %arg7: memref<8x1xf32, #tpu.memory_space<vmem>>) attributes {dimension_semantics = [#tpu.dimension_semantics<parallel>], iteration_bounds = array<i64: 1>, scalar_prefetch = 0 : i64, scratch_operands = 0 : i64, tpu.core_type = #tpu.core_type<tc>, window_params = [{transform_indices = @transform_0, window_bounds = array<i64: 8, 32>}, {pipeline_mode = #tpu.pipeline_mode<synchronous>, transform_indices = @transform_1, window_bounds = array<i64: 32, 128>}, {pipeline_mode = #tpu.pipeline_mode<synchronous>, transform_indices = @transform_2, window_bounds = array<i64: 1, 128>}, {pipeline_mode = #tpu.pipeline_mode<synchronous>, transform_indices = @transform_3, window_bounds = array<i64: 128, 9>}, {pipeline_mode = #tpu.pipeline_mode<synchronous>, transform_indices = @transform_4, window_bounds = array<i64: 1, 9>}, {transform_indices = @transform_5, window_bounds = array<i64: 8, 8>}, {transform_indices = @transform_6, window_bounds = array<i64: 8, 1>}]} {
    %c0 = arith.constant 0 : index
    %c0_0 = arith.constant 0 : index
    %0 = vector.load %arg1[%c0, %c0_0] : memref<8x32xf32, #tpu.memory_space<vmem>>, vector<8x32xf32>
    %1 = arith.truncf %0 : vector<8x32xf32> to vector<8x32xbf16>
    %c0_1 = arith.constant 0 : index
    %c0_2 = arith.constant 0 : index
    %2 = vector.load %arg2[%c0_1, %c0_2] : memref<32x128xbf16, #tpu.memory_space<vmem>>, vector<32x128xbf16>
    %cst = arith.constant dense<0.000000e+00> : vector<8x128xf32>
    %3 = tpu.matmul %1, %2, %cst {dimension_numbers = #tpu.dot_dimension_numbers<[1], [0], [0], [1], [0, 0, 1, 1], [], []>} : vector<8x32xbf16>, vector<32x128xbf16>, vector<8x128xf32> -> vector<8x128xf32>
    %c0_3 = arith.constant 0 : index
    %c0_4 = arith.constant 0 : index
    %4 = vector.load %arg3[%c0_3, %c0_4] : memref<1x128xf32, #tpu.memory_space<vmem>>, vector<1x128xf32>
    %5 = vector.broadcast %4 : vector<1x128xf32> to vector<8x128xf32>
    %6 = arith.addf %3, %5 : vector<8x128xf32>
    %cst_5 = arith.constant 0.000000e+00 : f32
    %7 = vector.broadcast %cst_5 : f32 to vector<8x128xf32>
    %8 = arith.maximumf %6, %7 : vector<8x128xf32>
    %9 = arith.truncf %8 : vector<8x128xf32> to vector<8x128xbf16>
    %c0_6 = arith.constant 0 : index
    %c0_7 = arith.constant 0 : index
    %10 = vector.load %arg4[%c0_6, %c0_7] : memref<128x9xbf16, #tpu.memory_space<vmem>>, vector<128x9xbf16>
    %cst_8 = arith.constant dense<0.000000e+00> : vector<8x9xf32>
    %11 = tpu.matmul %9, %10, %cst_8 {dimension_numbers = #tpu.dot_dimension_numbers<[1], [0], [0], [1], [0, 0, 1, 1], [], []>} : vector<8x128xbf16>, vector<128x9xbf16>, vector<8x9xf32> -> vector<8x9xf32>
    %c0_9 = arith.constant 0 : index
    %c0_10 = arith.constant 0 : index
    %12 = vector.load %arg5[%c0_9, %c0_10] : memref<1x9xf32, #tpu.memory_space<vmem>>, vector<1x9xf32>
    %13 = vector.broadcast %12 : vector<1x9xf32> to vector<8x9xf32>
    %14 = arith.addf %11, %13 : vector<8x9xf32>
    %15 = vector.extract_strided_slice %0 {offsets = [0, 0], sizes = [8, 8], strides = [1, 1]} : vector<8x32xf32> to vector<8x8xf32>
    %cst_11 = arith.constant 1.000000e-10 : f32
    %16 = vector.broadcast %cst_11 : f32 to vector<8x8xf32>
    %17 = arith.addf %15, %16 : vector<8x8xf32>
    %18 = math.log %17 : vector<8x8xf32>
    %19 = vector.extract_strided_slice %14 {offsets = [0, 0], sizes = [8, 8], strides = [1, 1]} : vector<8x9xf32> to vector<8x8xf32>
    %20 = arith.addf %19, %18 : vector<8x8xf32>
    %c0_12 = arith.constant 0 : index
    %c0_13 = arith.constant 0 : index
    %21 = vector.load %arg6[%c0_12, %c0_13] : memref<8x8xf32, #tpu.memory_space<vmem>>, vector<8x8xf32>
    tpu.vector_store %arg6[%c0_12, %c0_13], %20 {strides = array<i32>} : memref<8x8xf32, #tpu.memory_space<vmem>>, vector<8x8xf32>,
    %22 = vector.extract_strided_slice %14 {offsets = [0, 8], sizes = [8, 1], strides = [1, 1]} : vector<8x9xf32> to vector<8x1xf32>
    %c0_14 = arith.constant 0 : index
    %c0_15 = arith.constant 0 : index
    %23 = vector.load %arg7[%c0_14, %c0_15] : memref<8x1xf32, #tpu.memory_space<vmem>>, vector<8x1xf32>
    tpu.vector_store %arg7[%c0_14, %c0_15], %22 {strides = array<i32>} : memref<8x1xf32, #tpu.memory_space<vmem>>, vector<8x1xf32>,
    return
  }
  func.func @transform_0(%arg0: i32) -> (i32, i32) {
    %c0_i32 = arith.constant 0 : i32
    %c0_i32_0 = arith.constant 0 : i32
    return %arg0, %c0_i32 : i32, i32
  }
  func.func @transform_1(%arg0: i32) -> (i32, i32) {
    %c0_i32 = arith.constant 0 : i32
    %c0_i32_0 = arith.constant 0 : i32
    %c0_i32_1 = arith.constant 0 : i32
    return %c0_i32, %c0_i32_0 : i32, i32
  }
  func.func @transform_2(%arg0: i32) -> (i32, i32) {
    %c0_i32 = arith.constant 0 : i32
    %c0_i32_0 = arith.constant 0 : i32
    %c0_i32_1 = arith.constant 0 : i32
    return %c0_i32, %c0_i32_0 : i32, i32
  }
  func.func @transform_3(%arg0: i32) -> (i32, i32) {
    %c0_i32 = arith.constant 0 : i32
    %c0_i32_0 = arith.constant 0 : i32
    %c0_i32_1 = arith.constant 0 : i32
    return %c0_i32, %c0_i32_0 : i32, i32
  }
  func.func @transform_4(%arg0: i32) -> (i32, i32) {
    %c0_i32 = arith.constant 0 : i32
    %c0_i32_0 = arith.constant 0 : i32
    %c0_i32_1 = arith.constant 0 : i32
    return %c0_i32, %c0_i32_0 : i32, i32
  }
  func.func @transform_5(%arg0: i32) -> (i32, i32) {
    %c0_i32 = arith.constant 0 : i32
    %c0_i32_0 = arith.constant 0 : i32
    return %arg0, %c0_i32 : i32, i32
  }
  func.func @transform_6(%arg0: i32) -> (i32, i32) {
    %c0_i32 = arith.constant 0 : i32
    %c0_i32_0 = arith.constant 0 : i32
    return %arg0, %c0_i32 : i32, i32
  }
}

</mosaic_0001>

<llo_original>
// kernel: action_masked_model_forward.1
$region0: #{action_masked_model_forward.1}
  #allocation0 [shape = 'u32[]', space=smem, size = 0x4, offset = 0x4, fixed_abs, tag = 'smem constant byte address 0x4 - core index']
  #allocation1 [shape = 'u32[144,128]{1,0:T(1,128)}', space=vmem, size = 0x12000, scoped, tag = 'internal scratch']
  %s0 = inlined_call_operand.vmem [shape: f32[8,32], index: 0, kind: input, shape index: {}]
  %s1 = inlined_call_operand.vmem [shape: bf16[32,128], index: 1, kind: input, shape index: {}]
  %s2 = inlined_call_operand.vmem [shape: f32[1,128], index: 2, kind: input, shape index: {}]
  %s3 = inlined_call_operand.vmem [shape: bf16[128,9], index: 3, kind: input, shape index: {}]
  %s4 = inlined_call_operand.vmem [shape: f32[1,9], index: 4, kind: input, shape index: {}]
  %s5 = inlined_call_operand.hbm [shape: f32[8,8], index: 5, kind: output, shape index: {0}]
  %s6 = inlined_call_operand.vmem [shape: f32[8,1], index: 6, kind: output, shape index: {1}]
  %7 = xla_tuple %s5, %s6
  %s8 = sld [smem:[#allocation0]]
  $region38: #{action_masked_model_forward.1} parent=0
    _
  %s10 = ssub.s32 1, %s8
  %s11 = scalar_select 0, %s10, %s8
  $region1: #{action_masked_model_forward.1} parent=0
    #allocation2 [shape = 'u8[4096]{0}', space=vmem, size = 0x1000, scoped, tag = 'output window, operand 0, single buffered']
    #allocation3 [shape = 's32[1]{0}', space=sflag, size = 0x4, scoped, tag = 'scoped memory for action_masked_model_forward.1']
    %12 = vsyncpa [#allocation3], 0
    // Predicated region
    $region2: #{action_masked_model_forward.1} parent=1 // pred_check
      _
    $region3: #{action_masked_model_forward.1} parent=1 // pred_check_branch
      %14 = sbr.rel (0) target = $region5
    $region4: #{action_masked_model_forward.1} parent=1 // pred_region
      _
    $region5: #{action_masked_model_forward.1} parent=1 // pred_fallthru
      _
    // Predicated region
    $region6: #{action_masked_model_forward.1} parent=1 // pred_check
      _
    $region7: #{action_masked_model_forward.1} parent=1 // pred_check_branch
      %16 = sbr.rel (0) target = $region9
    $region8: #{action_masked_model_forward.1} parent=1 // pred_region
      _
    $region9: #{action_masked_model_forward.1} parent=1 // pred_fallthru
      _
    // Predicated region
    $region10: #{action_masked_model_forward.1} parent=1 // pred_check
      _
    $region11: #{action_masked_model_forward.1} parent=1 // pred_check_branch
      %18 = sbr.rel (0) target = $region13
    $region12: #{action_masked_model_forward.1} parent=1 // pred_region
      _
    $region13: #{action_masked_model_forward.1} parent=1 // pred_fallthru
      _
    // Predicated region
    $region14: #{action_masked_model_forward.1} parent=1 // pred_check
      _
    $region15: #{action_masked_model_forward.1} parent=1 // pred_check_branch
      %20 = sbr.rel (0) target = $region17
    $region16: #{action_masked_model_forward.1} parent=1 // pred_region
      _
    $region17: #{action_masked_model_forward.1} parent=1 // pred_fallthru
      _
    // Predicated region
    $region18: #{action_masked_model_forward.1} parent=1 // pred_check
      _
    $region19: #{action_masked_model_forward.1} parent=1 // pred_check_branch
      %22 = sbr.rel (0) target = $region21
    $region20: #{action_masked_model_forward.1} parent=1 // pred_region
      _
    $region21: #{action_masked_model_forward.1} parent=1 // pred_fallthru
      _
    %v24 = vld [vmem:[%s0] sm:$0xff]
    %v25 = vpack.c.bf16 %v24, %v24
    %v26 = vld [vmem:[%s1] sm:$0xf]
    %v27 = vld [vmem:[%s1 + $0x4] sm:$0xf]
    %v28 = vld [vmem:[%s1 + $0x8] sm:$0xf]
    %v29 = vld [vmem:[%s1 + $0xc] sm:$0xf]
    %v30 = vld [vmem:[%s2] sm:$0x1]
    %v32 = vlaneseq
    %v33 = vshrl.u32 %v32, 7
    %v34 = vsub.s32 0, %v33
    %v35 = vrot.slane %v30, %v34
    %v41 = vunpack.c.l.b16 %v26
    %v42 = vunpack.c.l.b16 %v27
    %v43 = vunpack.c.l.b16 %v28
    %v44 = vunpack.c.l.b16 %v29
    %v45 = vpack.c.b16 %v42, %v41
    %v46 = vpack.c.b16 %v44, %v43
    %vm49 = vcmask 261120
    %v51 = vsel %vm49, %v25, 0
    %53 = vmatprep.subr.bf16.mxu0 0
    %54 = vmatpush1.bf16.msra.mxu0 0
    %55 = vmatprep.subr.bf16.mxu0 0
    %56 = vmatpush1.bf16.msra.mxu0 0
    %57 = vmatprep.subr.bf16.mxu0 0
    %58 = vmatpush1.bf16.msra.mxu0 0
    %59 = vmatprep.subr.bf16.mxu0 0
    %60 = vmatpush1.bf16.msra.mxu0 0
    %61 = vmatprep.subr.bf16.mxu0 0
    %62 = vmatpush1.bf16.msra.mxu0 0
    %63 = vmatprep.subr.bf16.mxu0 0
    %64 = vmatpush1.bf16.msra.mxu0 0
    %65 = vmatprep.subr.bf16.mxu0 0
    %66 = vmatpush1.bf16.msra.mxu0 %v46
    %67 = vmatprep.subr.bf16.mxu0 0
    %68 = vmatpush1.bf16.msra.mxu0 %v45
    %69 = vmatprep.subr.bf16.mxu0 0
    %70 = vmatpush2.bf16.msra.mxu0 0
    %71 = vmatprep.subr.bf16.mxu0 0
    %72 = vmatpush2.bf16.msra.mxu0 0
    %73 = vmatprep.subr.bf16.mxu0 0
    %74 = vmatpush2.bf16.msra.mxu0 0
    %75 = vmatprep.subr.bf16.mxu0 0
    %76 = vmatpush2.bf16.msra.mxu0 0
    %77 = vmatprep.subr.bf16.mxu0 0
    %78 = vmatpush2.bf16.msra.mxu0 0
    %79 = vmatprep.subr.bf16.mxu0 0
    %80 = vmatpush2.bf16.msra.mxu0 0
    %81 = vmatprep.subr.bf16.mxu0 0
    %82 = vmatpush2.bf16.msra.mxu0 0
    %83 = vmatprep.subr.bf16.mxu0 0
    %84 = vmatpush2.bf16.msra.mxu0 0
    %85 = vmatprep.mubr.bf16.mxu0 0
    %86 = vmatmul.mubr.bf16.gmra.mxu0 %v51
    %v87 = vpop.f32.mrf.mxu0
    %v88 = vadd.f32 %v35, %v87
    %v89 = vpop.f32.mrf.mxu0
    %v90 = vpop.f32.mrf.mxu0
    %v91 = vpop.f32.mrf.mxu0
    %92 = vdwg.mxu0
    %v93 = vmax.f32 %v88, 0.0
    %v94 = vpack.c.bf16 %v93, %v93
    %v95 = vld [vmem:[%s3] sm:$0xf]
    %v96 = vld [vmem:[%s3 + $0x4] sm:$0xf]
    %v97 = vld [vmem:[%s3 + $0x8] sm:$0xf]
    %v98 = vld [vmem:[%s3 + $0xc] sm:$0xf]
    %v99 = vld [vmem:[%s3 + $0x10] sm:$0xf]
    %v100 = vld [vmem:[%s3 + $0x14] sm:$0xf]
    %v101 = vld [vmem:[%s3 + $0x18] sm:$0xf]
    %v102 = vld [vmem:[%s3 + $0x1c] sm:$0xf]
    %v103 = vld [vmem:[%s3 + $0x20] sm:$0xf]
    %v104 = vld [vmem:[%s3 + $0x24] sm:$0xf]
    %v105 = vld [vmem:[%s3 + $0x28] sm:$0xf]
    %v106 = vld [vmem:[%s3 + $0x2c] sm:$0xf]
    %v107 = vld [vmem:[%s3 + $0x30] sm:$0xf]
    %v108 = vld [vmem:[%s3 + $0x34] sm:$0xf]
    %v109 = vld [vmem:[%s3 + $0x38] sm:$0xf]
    %v110 = vld [vmem:[%s3 + $0x3c] sm:$0xf]
    %v111 = vld [vmem:[%s4] sm:$0x1]
    %v113 = vlaneseq
    %v114 = vshrl.u32 %v113, 7
    %v115 = vsub.s32 0, %v114
    %v116 = vrot.slane %v111, %v115
    %v134 = vunpack.c.l.b16 %v95
    %v135 = vunpack.c.l.b16 %v96
    %v136 = vunpack.c.l.b16 %v97
    %v137 = vunpack.c.l.b16 %v98
    %v138 = vunpack.c.l.b16 %v99
    %v139 = vunpack.c.l.b16 %v100
    %v140 = vunpack.c.l.b16 %v101
    %v141 = vunpack.c.l.b16 %v102
    %v142 = vunpack.c.l.b16 %v103
    %v143 = vunpack.c.l.b16 %v104
    %v144 = vunpack.c.l.b16 %v105
    %v145 = vunpack.c.l.b16 %v106
    %v146 = vunpack.c.l.b16 %v107
    %v147 = vunpack.c.l.b16 %v108
    %v148 = vunpack.c.l.b16 %v109
    %v149 = vunpack.c.l.b16 %v110
    %v150 = vpack.c.b16 %v135, %v134
    %v151 = vpack.c.b16 %v137, %v136
    %v152 = vpack.c.b16 %v139, %v138
    %v153 = vpack.c.b16 %v141, %v140
    %v154 = vpack.c.b16 %v143, %v142
    %v155 = vpack.c.b16 %v145, %v144
    %v156 = vpack.c.b16 %v147, %v146
    %v157 = vpack.c.b16 %v149, %v148
    %166 = vmatprep.subr.bf16.mxu0 0
    %167 = vmatpush1.bf16.msra.mxu0 %v157
    %168 = vmatprep.subr.bf16.mxu0 0
    %169 = vmatpush1.bf16.msra.mxu0 %v156
    %170 = vmatprep.subr.bf16.mxu0 0
    %171 = vmatpush1.bf16.msra.mxu0 %v155
    %172 = vmatprep.subr.bf16.mxu0 0
    %173 = vmatpush1.bf16.msra.mxu0 %v154
    %174 = vmatprep.subr.bf16.mxu0 0
    %175 = vmatpush1.bf16.msra.mxu0 %v153
    %176 = vmatprep.subr.bf16.mxu0 0
    %177 = vmatpush1.bf16.msra.mxu0 %v152
    %178 = vmatprep.subr.bf16.mxu0 0
    %179 = vmatpush1.bf16.msra.mxu0 %v151
    %180 = vmatprep.subr.bf16.mxu0 0
    %181 = vmatpush1.bf16.msra.mxu0 %v150
    %182 = vmatprep.subr.bf16.mxu0 0
    %183 = vmatpush2.bf16.msra.mxu0 0
    %184 = vmatprep.subr.bf16.mxu0 0
    %185 = vmatpush2.bf16.msra.mxu0 0
    %186 = vmatprep.subr.bf16.mxu0 0
    %187 = vmatpush2.bf16.msra.mxu0 0
    %188 = vmatprep.subr.bf16.mxu0 0
    %189 = vmatpush2.bf16.msra.mxu0 0
    %190 = vmatprep.subr.bf16.mxu0 0
    %191 = vmatpush2.bf16.msra.mxu0 0
    %192 = vmatprep.subr.bf16.mxu0 0
    %193 = vmatpush2.bf16.msra.mxu0 0
    %194 = vmatprep.subr.bf16.mxu0 0
    %195 = vmatpush2.bf16.msra.mxu0 0
    %196 = vmatprep.subr.bf16.mxu0 0
    %197 = vmatpush2.bf16.msra.mxu0 0
    %198 = vmatprep.mubr.bf16.mxu0 0
    %199 = vmatmul.mubr.bf16.gmra.mxu0 %v94
    %v200 = vpop.f32.mrf.mxu0
    %v201 = vadd.f32 %v116, %v200
    %v202 = vpop.f32.mrf.mxu0
    %v203 = vpop.f32.mrf.mxu0
    %v204 = vpop.f32.mrf.mxu0
    %205 = vdwg.mxu0
    %v206 = vadd.f32 %v24, 1e-10
    %v207 = vlog2.pop %v206
    %v208 = vmul.f32 %v207, 0.6931472
    %v209 = vadd.f32 %v201, %v208
    %vm210 = vcmask 64512
    %211 = vst.msk [vmem:[#allocation2] sm:$0xff] %vm210, %v209
    %213 = vrot.lane.b32.xlu0 %v201, 120
    %v214 = vpop.permute.xlu0 %213
    %vm216 = vcmask 7168
    %217 = vst.msk [vmem:[%s6] sm:$0xff] %vm216, %v214
    // Predicated region
    $region22: #{action_masked_model_forward.1} parent=1 // pred_check
      _
    $region23: #{action_masked_model_forward.1} parent=1 // pred_check_branch
      %219 = sbr.rel (0) target = $region25
    $region24: #{action_masked_model_forward.1} parent=1 // pred_region
      %s221 = ssub.s32 128, 128
      %222 = vsyncadd [#allocation3], %s221
      %s224 = sshll.u32 [#allocation2], 4
      %s225 = int_to_ptr.vmem [resolvable:$true] %s224
      %227 = dma.vmem_to_hbm [thread:$0]  %s225, 128, %s5, [#allocation3]
    $region25: #{action_masked_model_forward.1} parent=1 // pred_fallthru
      _
    // Predicated region
    $region26: #{action_masked_model_forward.1} parent=1 // pred_check
      _
    $region27: #{action_masked_model_forward.1} parent=1 // pred_check_branch
      %229 = sbr.rel (0) target = $region29
    $region28: #{action_masked_model_forward.1} parent=1 // pred_region
      _
    $region29: #{action_masked_model_forward.1} parent=1 // pred_fallthru
      _
    // Predicated region
    $region30: #{action_masked_model_forward.1} parent=1 // pred_check
      _
    $region31: #{action_masked_model_forward.1} parent=1 // pred_check_branch
      %231 = sbr.rel (0) target = $region33
    $region32: #{action_masked_model_forward.1} parent=1 // pred_region
      %232 = dma.done [#allocation3], 128
    $region33: #{action_masked_model_forward.1} parent=1 // pred_fallthru
      _
    // Predicated region
    $region34: #{action_masked_model_forward.1} parent=1 // pred_check
      _
    $region35: #{action_masked_model_forward.1} parent=1 // pred_check_branch
      %234 = sbr.rel (0) target = $region37
    $region36: #{action_masked_model_forward.1} parent=1 // pred_region
      _
    $region37: #{action_masked_model_forward.1} parent=1 // pred_fallthru
      _
    %235 = vsyncpa [#allocation3], 1

</llo_original>
